<compile_context>
chip_gen: v7x
topology: tpu7x:2x2x1
jax: 0.10.0
libtpu: 0.0.40
codegen_flags: <defaults>
</compile_context>

<pallas_src>
import functools

import jax
import jax.numpy as jnp
from jax.experimental import pallas as pl
from jax.experimental.pallas import tpu as pltpu

_LANE = 128       # TPU lane width: fc2 output padded to this for dense stores
_SUBLANE = 16     # sublane multiple covering bf16 packing (f32 only needs 8)
_NEG_BIG = -1e30  # bias for padded logit lanes -> exp() underflows to exactly 0


def _round_up(x: int, m: int) -> int:
    return (x + m - 1) // m * m


def _cdiv(a: int, b: int) -> int:
    return (a + b - 1) // b


def siamese_head_kernel(o1_ref, o2_ref, w1_ref, b1_ref, w2_ref, b2_ref, out_ref):
    """One batch tile of the SiameseNetwork classification head."""
    # elementwise add in f32 (VPU work; v5e has no bf16 VPU). Inputs may be
    # streamed as bf16 — upcast here, no standalone cast pass outside.
    addition = o1_ref[...].astype(jnp.float32) + o2_ref[...].astype(jnp.float32)

    # fc1: bf16 MXU inputs, f32 accumulation, then relu
    h = jnp.dot(addition.astype(jnp.bfloat16), w1_ref[...],
                preferred_element_type=jnp.float32) + b1_ref[...]       # [TM, 384]
    h = jnp.maximum(h, 0.0)
    # dropout(p=0.5) -> identity at inference

    # fc2: lane-dense, padded to 128 output lanes (padded lanes carry -1e30 bias)
    logits = jnp.dot(h.astype(jnp.bfloat16), w2_ref[...],
                     preferred_element_type=jnp.float32) + b2_ref[...]  # [TM, 128]
    # dropout(p=0.5) -> identity at inference

    # softmax over dim=1; padded lanes contribute exp(-1e30 - m) == 0.
    # Exact divide: probabilities are exactly normalized in f32 (the few extra
    # VPU/EUP ops are hidden under the input DMAs in this mem-bound kernel).
    m = jnp.max(logits, axis=1, keepdims=True)
    e = jnp.exp(logits - m)
    denom = jnp.sum(e, axis=1, keepdims=True)
    out_ref[...] = (e / denom).astype(out_ref.dtype)                    # bf16 store


@functools.partial(jax.jit, static_argnames=("block_m",))
def siamese_head(output1, output2, w1_t, b1, w2_t, b2, *, block_m=512):
    """output1, output2: [B, H] pooled BERT embeddings (f32 or bf16 — bf16
    halves the dominant HBM traffic). w1_t: [H, 384], b1: [1, 384],
    w2_t: [384, 2], b2: [1, 2]. Returns f32 [B, 2] softmax probabilities."""
    B, H = output1.shape
    D1 = w1_t.shape[1]
    D2 = w2_t.shape[1]
    D2p = _LANE                                   # lane-dense fc2 width

    # ---- parameter prep (done in XLA outside the kernel, cached under jit) ----
    w1_b = w1_t.astype(jnp.bfloat16)                                     # [H, D1]
    w2_b = jnp.zeros((D1, D2p), jnp.bfloat16).at[:, :D2].set(
        w2_t.astype(jnp.bfloat16))                                        # [D1, 128]
    b1_f = b1.astype(jnp.float32).reshape(1, D1)
    b2_f = jnp.full((1, D2p), _NEG_BIG, jnp.float32).at[:, :D2].set(
        b2.astype(jnp.float32).reshape(1, D2))

    # ---- batch tiling: evenly cover the sublane-rounded batch (<= ~15 padded
    # rows per tile), and keep >= 2 grid steps when the batch allows it so both
    # v7x TensorCores get work under the "parallel" grid axis. ----
    B16 = _round_up(B, _SUBLANE)
    bm = max(_round_up(min(block_m, B16), _SUBLANE), _SUBLANE)
    nsteps = _cdiv(B16, bm)
    if nsteps == 1 and B16 >= 2 * _SUBLANE:
        nsteps = 2
    tm = _round_up(_cdiv(B16, nsteps), _SUBLANE)
    Bp = tm * nsteps
    if Bp != B:
        pad = ((0, Bp - B), (0, 0))
        output1 = jnp.pad(output1, pad)
        output2 = jnp.pad(output2, pad)

    grid = (nsteps,)

    row_spec = pl.BlockSpec((tm, H), lambda i: (i, 0))
    # weights/biases map to block (0,0) every step -> stay VMEM-resident
    w1_spec = pl.BlockSpec((H, D1), lambda i: (0, 0))
    b1_spec = pl.BlockSpec((1, D1), lambda i: (0, 0))
    w2_spec = pl.BlockSpec((D1, D2p), lambda i: (0, 0))
    b2_spec = pl.BlockSpec((1, D2p), lambda i: (0, 0))
    out_spec = pl.BlockSpec((tm, D2p), lambda i: (i, 0))

    # ---- VMEM budget: double-buffered streams + params + f32/bf16 temporaries;
    # floor 32 MiB (> v5e's 16 MiB default), cap 48 MiB (< v7x's 64 MiB). ----
    in_isz = output1.dtype.itemsize
    param_bytes = H * D1 * 2 + D1 * 4 + D1 * D2p * 2 + D2p * 4
    footprint = (2 * 2 * tm * H * in_isz            # o1/o2, double-buffered
                 + 2 * tm * D2p * 2                 # bf16 out, double-buffered
                 + 2 * param_bytes                  # weights/biases (dbl-buf)
                 + tm * (H * 6 + D1 * 6 + D2p * 12))  # in-kernel temporaries
    vmem_limit = min(max(32 << 20, (footprint * 3) // 2), 48 << 20)

    flops = 2 * Bp * H * D1 + 2 * Bp * D1 * D2p
    bytes_accessed = (2 * Bp * H * in_isz           # output1 / output2 streams
                      + param_bytes                 # fc1/fc2 weights + biases
                      + Bp * D2p * 2)               # padded bf16 probs out

    probs_padded = pl.pallas_call(
        siamese_head_kernel,
        out_shape=jax.ShapeDtypeStruct((Bp, D2p), jnp.bfloat16),
        grid=grid,
        in_specs=[row_spec, row_spec, w1_spec, b1_spec, w2_spec, b2_spec],
        out_specs=out_spec,
        compiler_params=pltpu.CompilerParams(
            dimension_semantics=("parallel",),
            vmem_limit_bytes=int(vmem_limit)),
        cost_estimate=pl.CostEstimate(flops=flops,
                                      transcendentals=Bp * D2p,
                                      bytes_accessed=bytes_accessed),
    )(output1, output2, w1_b, b1_f, w2_b, b2_f)

    # lane-dense [Bp, 128] bf16 store in-kernel; slice back to the real batch +
    # 2 classes and restore the module's f32 output dtype (negligible bytes).
    return probs_padded[:B, :D2].astype(jnp.float32)


def _reference(o1, o2, w1_t, b1, w2_t, b2):
    add = o1 + o2
    h = jnp.maximum(add @ w1_t + b1, 0.0)
    logits = h @ w2_t + b2
    return jax.nn.softmax(logits, axis=1)


if __name__ == "__main__":
    # Small, module-consistent shapes: batch=2, h_size=32 (scaled-down BERT
    # hidden), fc1 out = 384, fc2 out = 2 (fixed by the module definition).
    B, H, D1, D2 = 2, 32, 384, 2

    key = jax.random.PRNGKey(0)
    k1, k2, k3, k4, k5, k6 = jax.random.split(key, 6)

    # Deterministic synthetic "BERT pooled outputs" (f32 path).
    output1 = jax.random.normal(k1, (B, H), dtype=jnp.float32)
    output2 = jax.random.normal(k2, (B, H), dtype=jnp.float32)

    # Deterministic parameter init (nn.Linear-style uniform bounds).
    bound1 = 1.0 / (H ** 0.5)
    w1_t = jax.random.uniform(k3, (H, D1), jnp.float32, -bound1, bound1)
    b1 = jax.random.uniform(k4, (1, D1), jnp.float32, -bound1, bound1)
    bound2 = 1.0 / (D1 ** 0.5)
    w2_t = jax.random.uniform(k5, (D1, D2), jnp.float32, -bound2, bound2)
    b2 = jax.random.uniform(k6, (1, D2), jnp.float32, -bound2, bound2)

    probs = jax.block_until_ready(
        siamese_head(output1, output2, w1_t, b1, w2_t, b2))
    ref = _reference(output1, output2, w1_t, b1, w2_t, b2)
    # bf16 matmul inputs + bf16 output store -> compare at a relaxed tolerance
    assert probs.shape == (B, D2)
    assert jnp.allclose(probs, ref, atol=2e-2), (probs, ref)
    assert jnp.allclose(jnp.sum(probs, axis=1), 1.0, atol=1e-2)

    # Second check: bf16-streamed pooled outputs (the optimized path), a batch
    # that needs row padding, and a small block_m so the grid has 3 steps.
    B2, H2 = 40, 64
    kk = jax.random.split(jax.random.PRNGKey(1), 6)
    o1b = jax.random.normal(kk[0], (B2, H2), dtype=jnp.float32).astype(jnp.bfloat16)
    o2b = jax.random.normal(kk[1], (B2, H2), dtype=jnp.float32).astype(jnp.bfloat16)
    bnd1 = 1.0 / (H2 ** 0.5)
    w1b = jax.random.uniform(kk[2], (H2, D1), jnp.float32, -bnd1, bnd1)
    b1b = jax.random.uniform(kk[3], (1, D1), jnp.float32, -bnd1, bnd1)
    bnd2 = 1.0 / (D1 ** 0.5)
    w2b = jax.random.uniform(kk[4], (D1, D2), jnp.float32, -bnd2, bnd2)
    b2b = jax.random.uniform(kk[5], (1, D2), jnp.float32, -bnd2, bnd2)

    probs2 = jax.block_until_ready(
        siamese_head(o1b, o2b, w1b, b1b, w2b, b2b, block_m=16))
    ref2 = _reference(o1b.astype(jnp.float32), o2b.astype(jnp.float32),
                      w1b, b1b, w2b, b2b)
    assert probs2.shape == (B2, D2)
    assert jnp.allclose(probs2, ref2, atol=2e-2), (probs2, ref2)
    assert jnp.allclose(jnp.sum(probs2, axis=1), 1.0, atol=1e-2)

    print("KERNEL_OK")
</pallas_src>

<mosaic_0001>
module attributes {stable_mosaic.version = 11 : i64} {
  func.func @siamese_head_kernel(%arg0: i32, %arg1: memref<16x32xf32, #tpu.memory_space<vmem>>, %arg2: memref<16x32xf32, #tpu.memory_space<vmem>>, %arg3: memref<32x384xbf16, #tpu.memory_space<vmem>>, %arg4: memref<1x384xf32, #tpu.memory_space<vmem>>, %arg5: memref<384x128xbf16, #tpu.memory_space<vmem>>, %arg6: memref<1x128xf32, #tpu.memory_space<vmem>>, %arg7: memref<16x128xbf16, #tpu.memory_space<vmem>>) attributes {dimension_semantics = [#tpu.dimension_semantics<parallel>], iteration_bounds = array<i64: 1>, scalar_prefetch = 0 : i64, scratch_operands = 0 : i64, tpu.core_type = #tpu.core_type<tc>, window_params = [{transform_indices = @transform_0, window_bounds = array<i64: 16, 32>}, {transform_indices = @transform_1, window_bounds = array<i64: 16, 32>}, {pipeline_mode = #tpu.pipeline_mode<synchronous>, transform_indices = @transform_2, window_bounds = array<i64: 32, 384>}, {pipeline_mode = #tpu.pipeline_mode<synchronous>, transform_indices = @transform_3, window_bounds = array<i64: 1, 384>}, {pipeline_mode = #tpu.pipeline_mode<synchronous>, transform_indices = @transform_4, window_bounds = array<i64: 384, 128>}, {pipeline_mode = #tpu.pipeline_mode<synchronous>, transform_indices = @transform_5, window_bounds = array<i64: 1, 128>}, {transform_indices = @transform_6, window_bounds = array<i64: 16, 128>}]} {
    %c0 = arith.constant 0 : index
    %c0_0 = arith.constant 0 : index
    %0 = vector.load %arg1[%c0, %c0_0] : memref<16x32xf32, #tpu.memory_space<vmem>>, vector<16x32xf32>
    %c0_1 = arith.constant 0 : index
    %c0_2 = arith.constant 0 : index
    %1 = vector.load %arg2[%c0_1, %c0_2] : memref<16x32xf32, #tpu.memory_space<vmem>>, vector<16x32xf32>
    %2 = arith.addf %0, %1 : vector<16x32xf32>
    %3 = arith.truncf %2 : vector<16x32xf32> to vector<16x32xbf16>
    %c0_3 = arith.constant 0 : index
    %c0_4 = arith.constant 0 : index
    %4 = vector.load %arg3[%c0_3, %c0_4] : memref<32x384xbf16, #tpu.memory_space<vmem>>, vector<32x384xbf16>
    %cst = arith.constant dense<0.000000e+00> : vector<16x384xf32>
    %5 = tpu.matmul %3, %4, %cst {dimension_numbers = #tpu.dot_dimension_numbers<[1], [0], [0], [1], [0, 0, 1, 1], [], []>} : vector<16x32xbf16>, vector<32x384xbf16>, vector<16x384xf32> -> vector<16x384xf32>
    %c0_5 = arith.constant 0 : index
    %c0_6 = arith.constant 0 : index
    %6 = vector.load %arg4[%c0_5, %c0_6] : memref<1x384xf32, #tpu.memory_space<vmem>>, vector<1x384xf32>
    %7 = vector.broadcast %6 : vector<1x384xf32> to vector<16x384xf32>
    %8 = arith.addf %5, %7 : vector<16x384xf32>
    %cst_7 = arith.constant 0.000000e+00 : f32
    %9 = vector.broadcast %cst_7 : f32 to vector<16x384xf32>
    %10 = arith.maximumf %8, %9 : vector<16x384xf32>
    %11 = arith.truncf %10 : vector<16x384xf32> to vector<16x384xbf16>
    %c0_8 = arith.constant 0 : index
    %c0_9 = arith.constant 0 : index
    %12 = vector.load %arg5[%c0_8, %c0_9] : memref<384x128xbf16, #tpu.memory_space<vmem>>, vector<384x128xbf16>
    %cst_10 = arith.constant dense<0.000000e+00> : vector<16x128xf32>
    %13 = tpu.matmul %11, %12, %cst_10 {dimension_numbers = #tpu.dot_dimension_numbers<[1], [0], [0], [1], [0, 0, 1, 1], [], []>} : vector<16x384xbf16>, vector<384x128xbf16>, vector<16x128xf32> -> vector<16x128xf32>
    %c0_11 = arith.constant 0 : index
    %c0_12 = arith.constant 0 : index
    %14 = vector.load %arg6[%c0_11, %c0_12] : memref<1x128xf32, #tpu.memory_space<vmem>>, vector<1x128xf32>
    %15 = vector.broadcast %14 : vector<1x128xf32> to vector<16x128xf32>
    %16 = arith.addf %13, %15 : vector<16x128xf32>
    %cst_13 = arith.constant dense<0xFF800000> : vector<16xf32>
    %17 = vector.multi_reduction <maximumf>, %16, %cst_13 [1] : vector<16x128xf32> to vector<16xf32>
    %18 = vector.shape_cast %17 : vector<16xf32> to vector<16x1xf32>
    %19 = vector.broadcast %18 : vector<16x1xf32> to vector<16x128xf32>
    %20 = arith.subf %16, %19 : vector<16x128xf32>
    %21 = math.exp %20 : vector<16x128xf32>
    %cst_14 = arith.constant dense<0.000000e+00> : vector<16xf32>
    %22 = vector.multi_reduction <add>, %21, %cst_14 [1] : vector<16x128xf32> to vector<16xf32>
    %23 = vector.shape_cast %22 : vector<16xf32> to vector<16x1xf32>
    %24 = vector.broadcast %23 : vector<16x1xf32> to vector<16x128xf32>
    %25 = arith.divf %21, %24 : vector<16x128xf32>
    %26 = arith.truncf %25 : vector<16x128xf32> to vector<16x128xbf16>
    %c0_15 = arith.constant 0 : index
    %c0_16 = arith.constant 0 : index
    %27 = vector.load %arg7[%c0_15, %c0_16] : memref<16x128xbf16, #tpu.memory_space<vmem>>, vector<16x128xbf16>
    tpu.vector_store %arg7[%c0_15, %c0_16], %26 {strides = array<i32>} : memref<16x128xbf16, #tpu.memory_space<vmem>>, vector<16x128xbf16>,
    return
  }
  func.func @transform_0(%arg0: i32) -> (i32, i32) {
    %c0_i32 = arith.constant 0 : i32
    %c0_i32_0 = arith.constant 0 : i32
    return %arg0, %c0_i32 : i32, i32
  }
  func.func @transform_1(%arg0: i32) -> (i32, i32) {
    %c0_i32 = arith.constant 0 : i32
    %c0_i32_0 = arith.constant 0 : i32
    return %arg0, %c0_i32 : i32, i32
  }
  func.func @transform_2(%arg0: i32) -> (i32, i32) {
    %c0_i32 = arith.constant 0 : i32
    %c0_i32_0 = arith.constant 0 : i32
    %c0_i32_1 = arith.constant 0 : i32
    return %c0_i32, %c0_i32_0 : i32, i32
  }
  func.func @transform_3(%arg0: i32) -> (i32, i32) {
    %c0_i32 = arith.constant 0 : i32
    %c0_i32_0 = arith.constant 0 : i32
    %c0_i32_1 = arith.constant 0 : i32
    return %c0_i32, %c0_i32_0 : i32, i32
  }
  func.func @transform_4(%arg0: i32) -> (i32, i32) {
    %c0_i32 = arith.constant 0 : i32
    %c0_i32_0 = arith.constant 0 : i32
    %c0_i32_1 = arith.constant 0 : i32
    return %c0_i32, %c0_i32_0 : i32, i32
  }
  func.func @transform_5(%arg0: i32) -> (i32, i32) {
    %c0_i32 = arith.constant 0 : i32
    %c0_i32_0 = arith.constant 0 : i32
    %c0_i32_1 = arith.constant 0 : i32
    return %c0_i32, %c0_i32_0 : i32, i32
  }
  func.func @transform_6(%arg0: i32) -> (i32, i32) {
    %c0_i32 = arith.constant 0 : i32
    %c0_i32_0 = arith.constant 0 : i32
    return %arg0, %c0_i32 : i32, i32
  }
}

</mosaic_0001>

<llo_original>
// kernel: siamese_head.1
$region0: #{siamese_head.1}
  #allocation0 [shape = 'u32[]', space=smem, size = 0x4, offset = 0x4, fixed_abs, tag = 'smem constant byte address 0x4 - core index']
  #allocation1 [shape = 'u32[144,128]{1,0:T(1,128)}', space=vmem, size = 0x12000, scoped, tag = 'internal scratch']
  %s0 = inlined_call_operand.vmem [shape: f32[16,32], index: 0, kind: input, shape index: {}]
  %s1 = inlined_call_operand.vmem [shape: f32[16,32], index: 1, kind: input, shape index: {}]
  %s2 = inlined_call_operand.vmem [shape: bf16[32,384], index: 2, kind: input, shape index: {}]
  %s3 = inlined_call_operand.vmem [shape: f32[1,384], index: 3, kind: input, shape index: {}]
  %s4 = inlined_call_operand.vmem [shape: bf16[384,128], index: 4, kind: input, shape index: {}]
  %s5 = inlined_call_operand.vmem [shape: f32[1,128], index: 5, kind: input, shape index: {}]
  %s6 = inlined_call_operand.vmem [shape: bf16[16,128], index: 6, kind: output, shape index: {}]
  %s7 = sld [smem:[#allocation0]]
  $region34: #{siamese_head.1} parent=0
    _
  %s9 = ssub.s32 1, %s7
  %s10 = scalar_select 0, %s9, %s7
  // Predicated region
  $region2: #{siamese_head.1} parent=0 // pred_check
    _
  $region3: #{siamese_head.1} parent=0 // pred_check_branch
    %12 = sbr.rel (0) target = $region5
  $region4: #{siamese_head.1} parent=0 // pred_region
    _
  $region5: #{siamese_head.1} parent=0 // pred_fallthru
    _
  // Predicated region
  $region6: #{siamese_head.1} parent=0 // pred_check
    _
  $region7: #{siamese_head.1} parent=0 // pred_check_branch
    %14 = sbr.rel (0) target = $region9
  $region8: #{siamese_head.1} parent=0 // pred_region
    _
  $region9: #{siamese_head.1} parent=0 // pred_fallthru
    _
  // Predicated region
  $region10: #{siamese_head.1} parent=0 // pred_check
    _
  $region11: #{siamese_head.1} parent=0 // pred_check_branch
    %16 = sbr.rel (0) target = $region13
  $region12: #{siamese_head.1} parent=0 // pred_region
    _
  $region13: #{siamese_head.1} parent=0 // pred_fallthru
    _
  // Predicated region
  $region14: #{siamese_head.1} parent=0 // pred_check
    _
  $region15: #{siamese_head.1} parent=0 // pred_check_branch
    %18 = sbr.rel (0) target = $region17
  $region16: #{siamese_head.1} parent=0 // pred_region
    _
  $region17: #{siamese_head.1} parent=0 // pred_fallthru
    _
  // Predicated region
  $region18: #{siamese_head.1} parent=0 // pred_check
    _
  $region19: #{siamese_head.1} parent=0 // pred_check_branch
    %20 = sbr.rel (0) target = $region21
  $region20: #{siamese_head.1} parent=0 // pred_region
    _
  $region21: #{siamese_head.1} parent=0 // pred_fallthru
    _
  // Predicated region
  $region22: #{siamese_head.1} parent=0 // pred_check
    _
  $region23: #{siamese_head.1} parent=0 // pred_check_branch
    %22 = sbr.rel (0) target = $region25
  $region24: #{siamese_head.1} parent=0 // pred_region
    _
  $region25: #{siamese_head.1} parent=0 // pred_fallthru
    _
  %v24 = vld [vmem:[%s0] sm:$0xff]
  %v25 = vld [vmem:[%s0 + $0x8] sm:$0xff]
  %v26 = vld [vmem:[%s1] sm:$0xff]
  %v27 = vld [vmem:[%s1 + $0x8] sm:$0xff]
  %v28 = vadd.f32 %v24, %v26
  %v29 = vadd.f32 %v25, %v27
  %v30 = vpack.c.bf16 %v29, %v28
  %v31 = vld [vmem:[%s2] sm:$0xff]
  %v32 = vld [vmem:[%s2 + $0x8] sm:$0xf]
  %v33 = vld [vmem:[%s2 + $0xc] sm:$0xff]
  %v34 = vld [vmem:[%s2 + $0x14] sm:$0xf]
  %v35 = vld [vmem:[%s2 + $0x18] sm:$0xff]
  %v36 = vld [vmem:[%s2 + $0x20] sm:$0xf]
  %v37 = vld [vmem:[%s2 + $0x24] sm:$0xff]
  %v38 = vld [vmem:[%s2 + $0x2c] sm:$0xf]
  %v39 = vld [vmem:[%s3] sm:$0x7]
  %v41 = vlaneseq
  %v42 = vshrl.u32 %v41, 7
  %v43 = vsub.s32 0, %v42
  %v44 = vrot.slane %v39, %v43
  %v45 = vlaneseq
  %v46 = vshrl.u32 %v45, 7
  %v47 = vsub.s32 1, %v46
  %v48 = vrot.slane %v39, %v47
  %v49 = vlaneseq
  %v50 = vshrl.u32 %v49, 7
  %v51 = vsub.s32 2, %v50
  %v52 = vrot.slane %v39, %v51
  %v64 = vunpack.c.l.b16 %v31
  %v65 = vunpack.c.h.b16 %v31
  %v66 = vunpack.c.l.b16 %v32
  %v67 = vunpack.c.l.b16 %v33
  %v68 = vunpack.c.h.b16 %v33
  %v69 = vunpack.c.l.b16 %v34
  %v70 = vunpack.c.l.b16 %v35
  %v71 = vunpack.c.h.b16 %v35
  %v72 = vunpack.c.l.b16 %v36
  %v73 = vunpack.c.l.b16 %v37
  %v74 = vunpack.c.h.b16 %v37
  %v75 = vunpack.c.l.b16 %v38
  %v76 = vpack.c.b16 %v67, %v64
  %v77 = vpack.c.b16 %v68, %v65
  %v78 = vpack.c.b16 %v69, %v66
  %v79 = vpack.c.b16 %v73, %v70
  %v80 = vpack.c.b16 %v74, %v71
  %v81 = vpack.c.b16 %v75, %v72
  %vm88 = vcmask 261120
  %v90 = vsel %vm88, %v30, 0
  %92 = vmatprep.subr.bf16.mxu0 %v77
  %93 = vmatpush1.bf16.msra.mxu0 %v76
  %94 = vmatprep.subr.bf16.mxu0 %v80
  %95 = vmatpush1.bf16.msra.mxu0 %v79
  %96 = vmatprep.subr.bf16.mxu0 0
  %97 = vmatpush1.bf16.msra.mxu0 0
  %98 = vmatprep.subr.bf16.mxu0 0
  %99 = vmatpush1.bf16.msra.mxu0 0
  %100 = vmatprep.subr.bf16.mxu0 0
  %101 = vmatpush1.bf16.msra.mxu0 0
  %102 = vmatprep.subr.bf16.mxu0 0
  %103 = vmatpush1.bf16.msra.mxu0 0
  %104 = vmatprep.subr.bf16.mxu0 0
  %105 = vmatpush1.bf16.msra.mxu0 0
  %106 = vmatprep.subr.bf16.mxu0 0
  %107 = vmatpush1.bf16.msra.mxu0 0
  %108 = vmatprep.subr.bf16.mxu0 0
  %109 = vmatpush1.bf16.msra.mxu0 0
  %110 = vmatprep.subr.bf16.mxu0 0
  %111 = vmatpush1.bf16.msra.mxu0 0
  %112 = vmatprep.subr.bf16.mxu0 0
  %113 = vmatpush1.bf16.msra.mxu0 0
  %114 = vmatprep.subr.bf16.mxu0 0
  %115 = vmatpush1.bf16.msra.mxu0 0
  %116 = vmatprep.subr.bf16.mxu0 0
  %117 = vmatpush1.bf16.msra.mxu0 0
  %118 = vmatprep.subr.bf16.mxu0 0
  %119 = vmatpush1.bf16.msra.mxu0 0
  %120 = vmatprep.subr.bf16.mxu0 0
  %121 = vmatpush1.bf16.msra.mxu0 0
  %122 = vmatprep.subr.bf16.mxu0 0
  %123 = vmatpush1.bf16.msra.mxu0 0
  %124 = vmatprep.mubr.bf16.mxu0 0
  %125 = vmatmul.mubr.bf16.gmra.mrb[0].mxu0 %v90
  %v126 = vpop.f32.mrb[0].mxu0
  %v127 = vadd.f32 %v44, %v126
  %v128 = vpop.f32.mrb[0].mxu0
  %v129 = vadd.f32 %v48, %v128
  %v130 = vpop.f32.mrb[0].mxu0
  %v131 = vadd.f32 %v44, %v130
  %v132 = vpop.f32.mrb[0].mxu0
  %v133 = vadd.f32 %v48, %v132
  %134 = vdwg.mxu0
  %135 = vmatprep.subr.bf16.mxu0 0
  %136 = vmatpush1.bf16.msra.mxu0 %v78
  %137 = vmatprep.subr.bf16.mxu0 0
  %138 = vmatpush1.bf16.msra.mxu0 %v81
  %139 = vmatprep.subr.bf16.mxu0 0
  %140 = vmatpush1.bf16.msra.mxu0 0
  %141 = vmatprep.subr.bf16.mxu0 0
  %142 = vmatpush1.bf16.msra.mxu0 0
  %143 = vmatprep.subr.bf16.mxu0 0
  %144 = vmatpush1.bf16.msra.mxu0 0
  %145 = vmatprep.subr.bf16.mxu0 0
  %146 = vmatpush1.bf16.msra.mxu0 0
  %147 = vmatprep.subr.bf16.mxu0 0
  %148 = vmatpush1.bf16.msra.mxu0 0
  %149 = vmatprep.subr.bf16.mxu0 0
  %150 = vmatpush1.bf16.msra.mxu0 0
  %151 = vmatprep.subr.bf16.mxu0 0
  %152 = vmatpush1.bf16.msra.mxu0 0
  %153 = vmatprep.subr.bf16.mxu0 0
  %154 = vmatpush1.bf16.msra.mxu0 0
  %155 = vmatprep.subr.bf16.mxu0 0
  %156 = vmatpush1.bf16.msra.mxu0 0
  %157 = vmatprep.subr.bf16.mxu0 0
  %158 = vmatpush1.bf16.msra.mxu0 0
  %159 = vmatprep.subr.bf16.mxu0 0
  %160 = vmatpush1.bf16.msra.mxu0 0
  %161 = vmatprep.subr.bf16.mxu0 0
  %162 = vmatpush1.bf16.msra.mxu0 0
  %163 = vmatprep.subr.bf16.mxu0 0
  %164 = vmatpush1.bf16.msra.mxu0 0
  %165 = vmatprep.subr.bf16.mxu0 0
  %166 = vmatpush1.bf16.msra.mxu0 0
  %167 = vmatprep.mubr.bf16.mxu0 0
  %168 = vmatmul.mubr.bf16.gmra.mrb[0].mxu0 %v90
  %v169 = vpop.f32.mrb[0].mxu0
  %v170 = vadd.f32 %v52, %v169
  %v171 = vpop.f32.mrb[0].mxu0
  %v172 = vpop.f32.mrb[0].mxu0
  %v173 = vadd.f32 %v52, %v172
  %v174 = vpop.f32.mrb[0].mxu0
  %175 = vdwg.mxu0
  %v176 = vmax.f32 %v127, 0.0
  %v177 = vmax.f32 %v129, 0.0
  %v178 = vmax.f32 %v170, 0.0
  %v179 = vmax.f32 %v131, 0.0
  %v180 = vmax.f32 %v133, 0.0
  %v181 = vmax.f32 %v173, 0.0
  %v182 = vpack.c.bf16 %v179, %v176
  %v183 = vpack.c.bf16 %v180, %v177
  %v184 = vpack.c.bf16 %v181, %v178
  %v185 = vld [vmem:[%s4] sm:$0xf]
  %v186 = vld [vmem:[%s4 + $0x4] sm:$0xf]
  %v187 = vld [vmem:[%s4 + $0x8] sm:$0xf]
  %v188 = vld [vmem:[%s4 + $0xc] sm:$0xf]
  %v189 = vld [vmem:[%s4 + $0x10] sm:$0xf]
  %v190 = vld [vmem:[%s4 + $0x14] sm:$0xf]
  %v191 = vld [vmem:[%s4 + $0x18] sm:$0xf]
  %v192 = vld [vmem:[%s4 + $0x1c] sm:$0xf]
  %v193 = vld [vmem:[%s4 + $0x20] sm:$0xf]
  %v194 = vld [vmem:[%s4 + $0x24] sm:$0xf]
  %v195 = vld [vmem:[%s4 + $0x28] sm:$0xf]
  %v196 = vld [vmem:[%s4 + $0x2c] sm:$0xf]
  %v197 = vld [vmem:[%s4 + $0x30] sm:$0xf]
  %v198 = vld [vmem:[%s4 + $0x34] sm:$0xf]
  %v199 = vld [vmem:[%s4 + $0x38] sm:$0xf]
  %v200 = vld [vmem:[%s4 + $0x3c] sm:$0xf]
  %v201 = vld [vmem:[%s4 + $0x40] sm:$0xf]
  %v202 = vld [vmem:[%s4 + $0x44] sm:$0xf]
  %v203 = vld [vmem:[%s4 + $0x48] sm:$0xf]
  %v204 = vld [vmem:[%s4 + $0x4c] sm:$0xf]
  %v205 = vld [vmem:[%s4 + $0x50] sm:$0xf]
  %v206 = vld [vmem:[%s4 + $0x54] sm:$0xf]
  %v207 = vld [vmem:[%s4 + $0x58] sm:$0xf]
  %v208 = vld [vmem:[%s4 + $0x5c] sm:$0xf]
  %v209 = vld [vmem:[%s4 + $0x60] sm:$0xf]
  %v210 = vld [vmem:[%s4 + $0x64] sm:$0xf]
  %v211 = vld [vmem:[%s4 + $0x68] sm:$0xf]
  %v212 = vld [vmem:[%s4 + $0x6c] sm:$0xf]
  %v213 = vld [vmem:[%s4 + $0x70] sm:$0xf]
  %v214 = vld [vmem:[%s4 + $0x74] sm:$0xf]
  %v215 = vld [vmem:[%s4 + $0x78] sm:$0xf]
  %v216 = vld [vmem:[%s4 + $0x7c] sm:$0xf]
  %v217 = vld [vmem:[%s4 + $0x80] sm:$0xf]
  %v218 = vld [vmem:[%s4 + $0x84] sm:$0xf]
  %v219 = vld [vmem:[%s4 + $0x88] sm:$0xf]
  %v220 = vld [vmem:[%s4 + $0x8c] sm:$0xf]
  %v221 = vld [vmem:[%s4 + $0x90] sm:$0xf]
  %v222 = vld [vmem:[%s4 + $0x94] sm:$0xf]
  %v223 = vld [vmem:[%s4 + $0x98] sm:$0xf]
  %v224 = vld [vmem:[%s4 + $0x9c] sm:$0xf]
  %v225 = vld [vmem:[%s4 + $0xa0] sm:$0xf]
  %v226 = vld [vmem:[%s4 + $0xa4] sm:$0xf]
  %v227 = vld [vmem:[%s4 + $0xa8] sm:$0xf]
  %v228 = vld [vmem:[%s4 + $0xac] sm:$0xf]
  %v229 = vld [vmem:[%s4 + $0xb0] sm:$0xf]
  %v230 = vld [vmem:[%s4 + $0xb4] sm:$0xf]
  %v231 = vld [vmem:[%s4 + $0xb8] sm:$0xf]
  %v232 = vld [vmem:[%s4 + $0xbc] sm:$0xf]
  %v233 = vld [vmem:[%s5] sm:$0x1]
  %v235 = vlaneseq
  %v236 = vshrl.u32 %v235, 7
  %v237 = vsub.s32 0, %v236
  %v238 = vrot.slane %v233, %v237
  %v288 = vunpack.c.l.b16 %v185
  %v289 = vunpack.c.l.b16 %v186
  %v290 = vunpack.c.l.b16 %v187
  %v291 = vunpack.c.l.b16 %v188
  %v292 = vunpack.c.l.b16 %v189
  %v293 = vunpack.c.l.b16 %v190
  %v294 = vunpack.c.l.b16 %v191
  %v295 = vunpack.c.l.b16 %v192
  %v296 = vunpack.c.l.b16 %v193
  %v297 = vunpack.c.l.b16 %v194
  %v298 = vunpack.c.l.b16 %v195
  %v299 = vunpack.c.l.b16 %v196
  %v300 = vunpack.c.l.b16 %v197
  %v301 = vunpack.c.l.b16 %v198
  %v302 = vunpack.c.l.b16 %v199
  %v303 = vunpack.c.l.b16 %v200
  %v304 = vunpack.c.l.b16 %v201
  %v305 = vunpack.c.l.b16 %v202
  %v306 = vunpack.c.l.b16 %v203
  %v307 = vunpack.c.l.b16 %v204
  %v308 = vunpack.c.l.b16 %v205
  %v309 = vunpack.c.l.b16 %v206
  %v310 = vunpack.c.l.b16 %v207
  %v311 = vunpack.c.l.b16 %v208
  %v312 = vunpack.c.l.b16 %v209
  %v313 = vunpack.c.l.b16 %v210
  %v314 = vunpack.c.l.b16 %v211
  %v315 = vunpack.c.l.b16 %v212
  %v316 = vunpack.c.l.b16 %v213
  %v317 = vunpack.c.l.b16 %v214
  %v318 = vunpack.c.l.b16 %v215
  %v319 = vunpack.c.l.b16 %v216
  %v320 = vunpack.c.l.b16 %v217
  %v321 = vunpack.c.l.b16 %v218
  %v322 = vunpack.c.l.b16 %v219
  %v323 = vunpack.c.l.b16 %v220
  %v324 = vunpack.c.l.b16 %v221
  %v325 = vunpack.c.l.b16 %v222
  %v326 = vunpack.c.l.b16 %v223
  %v327 = vunpack.c.l.b16 %v224
  %v328 = vunpack.c.l.b16 %v225
  %v329 = vunpack.c.l.b16 %v226
  %v330 = vunpack.c.l.b16 %v227
  %v331 = vunpack.c.l.b16 %v228
  %v332 = vunpack.c.l.b16 %v229
  %v333 = vunpack.c.l.b16 %v230
  %v334 = vunpack.c.l.b16 %v231
  %v335 = vunpack.c.l.b16 %v232
  %v336 = vpack.c.b16 %v289, %v288
  %v337 = vpack.c.b16 %v291, %v290
  %v338 = vpack.c.b16 %v293, %v292
  %v339 = vpack.c.b16 %v295, %v294
  %v340 = vpack.c.b16 %v297, %v296
  %v341 = vpack.c.b16 %v299, %v298
  %v342 = vpack.c.b16 %v301, %v300
  %v343 = vpack.c.b16 %v303, %v302
  %v344 = vpack.c.b16 %v305, %v304
  %v345 = vpack.c.b16 %v307, %v306
  %v346 = vpack.c.b16 %v309, %v308
  %v347 = vpack.c.b16 %v311, %v310
  %v348 = vpack.c.b16 %v313, %v312
  %v349 = vpack.c.b16 %v315, %v314
  %v350 = vpack.c.b16 %v317, %v316
  %v351 = vpack.c.b16 %v319, %v318
  %v352 = vpack.c.b16 %v321, %v320
  %v353 = vpack.c.b16 %v323, %v322
  %v354 = vpack.c.b16 %v325, %v324
  %v355 = vpack.c.b16 %v327, %v326
  %v356 = vpack.c.b16 %v329, %v328
  %v357 = vpack.c.b16 %v331, %v330
  %v358 = vpack.c.b16 %v333, %v332
  %v359 = vpack.c.b16 %v335, %v334
  %384 = vmatprep.subr.bf16.mxu0 0
  %385 = vmatpush1.bf16.msra.mxu0 %v336
  %386 = vmatprep.subr.bf16.mxu0 0
  %387 = vmatpush1.bf16.msra.mxu0 %v337
  %388 = vmatprep.subr.bf16.mxu0 0
  %389 = vmatpush1.bf16.msra.mxu0 %v338
  %390 = vmatprep.subr.bf16.mxu0 0
  %391 = vmatpush1.bf16.msra.mxu0 %v339
  %392 = vmatprep.subr.bf16.mxu0 0
  %393 = vmatpush1.bf16.msra.mxu0 %v340
  %394 = vmatprep.subr.bf16.mxu0 0
  %395 = vmatpush1.bf16.msra.mxu0 %v341
  %396 = vmatprep.subr.bf16.mxu0 0
  %397 = vmatpush1.bf16.msra.mxu0 %v342
  %398 = vmatprep.subr.bf16.mxu0 0
  %399 = vmatpush1.bf16.msra.mxu0 %v343
  %400 = vmatprep.subr.bf16.mxu0 0
  %401 = vmatpush1.bf16.msra.mxu0 %v344
  %402 = vmatprep.subr.bf16.mxu0 0
  %403 = vmatpush1.bf16.msra.mxu0 %v345
  %404 = vmatprep.subr.bf16.mxu0 0
  %405 = vmatpush1.bf16.msra.mxu0 %v346
  %406 = vmatprep.subr.bf16.mxu0 0
  %407 = vmatpush1.bf16.msra.mxu0 %v347
  %408 = vmatprep.subr.bf16.mxu0 0
  %409 = vmatpush1.bf16.msra.mxu0 %v348
  %410 = vmatprep.subr.bf16.mxu0 0
  %411 = vmatpush1.bf16.msra.mxu0 %v349
  %412 = vmatprep.subr.bf16.mxu0 0
  %413 = vmatpush1.bf16.msra.mxu0 %v350
  %414 = vmatprep.subr.bf16.mxu0 0
  %415 = vmatpush1.bf16.msra.mxu0 %v351
  %416 = vmatprep.mubr.bf16.mxu0 %v183
  %417 = vmatmul.mubr.bf16.gmra.mrb[0].mxu0 %v182
  %v418 = vpop.f32.mrb[0].mxu0
  %v419 = vadd.f32 %v238, %v418
  %v420 = vpop.f32.mrb[0].mxu0
  %v421 = vpop.f32.mrb[0].mxu0
  %v422 = vadd.f32 %v238, %v421
  %v423 = vpop.f32.mrb[0].mxu0
  %424 = vdwg.mxu0
  %425 = vmatprep.subr.bf16.mxu0 0
  %426 = vmatpush1.bf16.msra.mxu0 %v352
  %427 = vmatprep.subr.bf16.mxu0 0
  %428 = vmatpush1.bf16.msra.mxu0 %v353
  %429 = vmatprep.subr.bf16.mxu0 0
  %430 = vmatpush1.bf16.msra.mxu0 %v354
  %431 = vmatprep.subr.bf16.mxu0 0
  %432 = vmatpush1.bf16.msra.mxu0 %v355
  %433 = vmatprep.subr.bf16.mxu0 0
  %434 = vmatpush1.bf16.msra.mxu0 %v356
  %435 = vmatprep.subr.bf16.mxu0 0
  %436 = vmatpush1.bf16.msra.mxu0 %v357
  %437 = vmatprep.subr.bf16.mxu0 0
  %438 = vmatpush1.bf16.msra.mxu0 %v358
  %439 = vmatprep.subr.bf16.mxu0 0
  %440 = vmatpush1.bf16.msra.mxu0 %v359
  %441 = vmatprep.subr.bf16.mxu0 0
  %442 = vmatpush1.bf16.msra.mxu0 0
  %443 = vmatprep.subr.bf16.mxu0 0
  %444 = vmatpush1.bf16.msra.mxu0 0
  %445 = vmatprep.subr.bf16.mxu0 0
  %446 = vmatpush1.bf16.msra.mxu0 0
  %447 = vmatprep.subr.bf16.mxu0 0
  %448 = vmatpush1.bf16.msra.mxu0 0
  %449 = vmatprep.subr.bf16.mxu0 0
  %450 = vmatpush1.bf16.msra.mxu0 0
  %451 = vmatprep.subr.bf16.mxu0 0
  %452 = vmatpush1.bf16.msra.mxu0 0
  %453 = vmatprep.subr.bf16.mxu0 0
  %454 = vmatpush1.bf16.msra.mxu0 0
  %455 = vmatprep.subr.bf16.mxu0 0
  %456 = vmatpush1.bf16.msra.mxu0 0
  %457 = vmatprep.mubr.bf16.mxu0 0
  %458 = vmatmul.mubr.bf16.gmra.mrb[0].mxu0 %v184
  %v459 = vpop.f32.mrb[0].mxu0
  %v460 = vadd.f32 %v419, %v459
  %v461 = vpop.f32.mrb[0].mxu0
  %v462 = vpop.f32.mrb[0].mxu0
  %v463 = vadd.f32 %v422, %v462
  %v464 = vpop.f32.mrb[0].mxu0
  %465 = vdwg.mxu0
  %466 = vmax.xlane.f32.xlu0 %v460
  %v467 = vpop.xlane.xlu0 %466
  %468 = vmax.xlane.f32.xlu0 %v463
  %v469 = vpop.xlane.xlu0 %468
  %v470 = vsub.f32 %v460, %v467
  %v471 = vsub.f32 %v463, %v469
  %v472 = vmul.f32 %v470, 1.442695
  %v473 = vpow.pop %v472
  %v474 = vmul.f32 %v471, 1.442695
  %v475 = vpow.pop %v474
  %476 = vadd.xlane.f32.xlu0 %v473
  %v477 = vpop.xlane.xlu0 %476
  %478 = vadd.xlane.f32.xlu0 %v475
  %v479 = vpop.xlane.xlu0 %478
  %v480 = vrcp.pop %v477
  %v481 = vmul.f32 %v473, %v480
  %v482 = vrcp.pop %v479
  %v483 = vmul.f32 %v475, %v482
  %v484 = vpack.c.bf16 %v483, %v481
  %v486 = vunpack.c.l.b16 %v484
  %v487 = vunpack.c.h.b16 %v484
  %v488 = vpack.c.b16 %v486, %v486
  %v489 = vpack.c.b16 %v487, %v487
  %492 = vst [vmem:[%s6] sm:$0xf] %v488
  %493 = vst [vmem:[%s6 + $0x4] sm:$0xf] %v489
  // Predicated region
  $region26: #{siamese_head.1} parent=0 // pred_check
    _
  $region27: #{siamese_head.1} parent=0 // pred_check_branch
    %495 = sbr.rel (0) target = $region29
  $region28: #{siamese_head.1} parent=0 // pred_region
    _
  $region29: #{siamese_head.1} parent=0 // pred_fallthru
    _
  // Predicated region
  $region30: #{siamese_head.1} parent=0 // pred_check
    _
  $region31: #{siamese_head.1} parent=0 // pred_check_branch
    %497 = sbr.rel (0) target = $region33
  $region32: #{siamese_head.1} parent=0 // pred_region
    _
  $region33: #{siamese_head.1} parent=0 // pred_fallthru
    _

</llo_original>
